<compile_context>
chip_gen: v7x
topology: tpu7x:2x2x1
jax: 0.10.0
libtpu: 0.0.40
codegen_flags: <defaults>
</compile_context>

<pallas_src>
import jax
import jax.numpy as jnp
from jax.experimental import pallas as pl
from jax.experimental.pallas import tpu as pltpu

# Module hyperparameters (synthetic, small)
EMBED_LEN = 16     # embedLen
HIDDEN_NUM = 32    # hiddenNum
CHI_DICT_LEN = 64  # chiDictLen
BATCH = 2
SEQ = 8


def decoder_kernel(x_ref, wih_ref, whh_ref, b_ref, h0_ref, c0_ref,
                   wcls_ref, bcls_ref,
                   pre_ref, hn_ref, cn_ref,
                   gx_s, h_all_s):
    TB, _ = x_ref.shape          # T*B time-major rows
    B, H = h0_ref.shape
    T = TB // B

    # ---- Hoisted off the serial chain ---------------------------------------
    # Input projection + fused bias for ALL timesteps in one matmul, staged
    # into VMEM scratch so the step loop only does aligned loads.
    gx_s[...] = (jnp.dot(x_ref[...], wih_ref[...],
                         preferred_element_type=jnp.float32) + b_ref[...])

    # Recurrent weight: loaded and cast to bf16 once (bf16-in / f32-accumulate
    # keeps each per-step MXU op a single pass on all generations).
    w_hh_bf = whh_ref[...].astype(jnp.bfloat16)
    # TODO(synk): on v5e, holding w_hh in MXU weight regs across steps via
    # pltpu.matmul_push_rhs/matmul_acc_lhs could shave re-push cycles if the
    # bundle dump shows Mosaic re-streaming the RHS each iteration.

    # ---- Serial recurrence (fully unrolled; T is small & static) ------------
    h = h0_ref[...]              # (B, H) f32 state
    c = c0_ref[...]              # (B, H) f32 state
    for t in range(T):
        gx = gx_s[t * B:(t + 1) * B, :]                       # (B, 4H) vld
        gates = gx + jnp.dot(h.astype(jnp.bfloat16), w_hh_bf,
                             preferred_element_type=jnp.float32)
        # Two full-vreg transcendentals instead of four per-gate ones.
        # sigmoid(x) = 0.5*tanh(0.5*x) + 0.5 -> a single native EUP op.
        sig = 0.5 * jnp.tanh(0.5 * gates) + 0.5   # lanes: [ i | f | . | o ]
        th = jnp.tanh(gates)                      # lanes: [ . | . | g | . ]
        i_g = sig[:, 0 * H:1 * H]
        f_g = sig[:, 1 * H:2 * H]
        g_g = th[:, 2 * H:3 * H]
        o_g = sig[:, 3 * H:4 * H]
        # (lane-offset extracts above go to the otherwise-idle XLU slot)
        c = f_g * c + i_g * g_g
        h = o_g * jnp.tanh(c)
        h_all_s[t * B:(t + 1) * B, :] = h          # contiguous row store

    # ---- Batched classification head: one matmul, one contiguous store ------
    logits = (jnp.dot(h_all_s[...], wcls_ref[...],
                      preferred_element_type=jnp.float32) + bcls_ref[...])
    pre_ref[...] = logits.astype(pre_ref.dtype)

    hn_ref[...] = h.astype(hn_ref.dtype)
    cn_ref[...] = c.astype(cn_ref.dtype)


def decoder_forward(x, h0, c0, params):
    """x: (B, T, E) batch_first; h0, c0: (1, B, H). Returns (pre, (h_n, c_n))."""
    B, T, E = x.shape
    H = h0.shape[-1]
    C = params["w_cls"].shape[1]

    # Wrapper-side layout plumbing (kept out of the kernel): time-major rows.
    x_tm = jnp.transpose(x, (1, 0, 2)).reshape(T * B, E)
    h0_2d = h0[0]    # (B, H)
    c0_2d = c0[0]    # (B, H)

    pre_tm, h_n, c_n = pl.pallas_call(
        decoder_kernel,
        out_shape=(
            jax.ShapeDtypeStruct((T * B, C), jnp.float32),
            jax.ShapeDtypeStruct((B, H), jnp.float32),
            jax.ShapeDtypeStruct((B, H), jnp.float32),
        ),
        # No grid: everything fits trivially in VMEM on v5e/v6e/v7x.
        # TODO(synk): for larger batches, add a leading "parallel" batch-tile
        # grid axis so v7x's second TensorCore takes half the batch.
        scratch_shapes=[
            pltpu.VMEM((T * B, 4 * H), jnp.float32),   # staged input projection
            pltpu.VMEM((T * B, H), jnp.float32),       # collected hidden states
        ],
    )(x_tm,
      params["w_ih"], params["w_hh"], params["b"],
      h0_2d, c0_2d,
      params["w_cls"], params["b_cls"])

    pre = pre_tm.reshape(T, B, C).transpose(1, 0, 2)   # back to (B, T, C)
    return pre, (h_n[None, ...], c_n[None, ...])


def init_params(key, embed_len, hidden, chi_dict_len):
    ks = jax.random.split(key, 6)
    s = 0.1
    # PyTorch LSTM stores weight_ih: (4H, E), weight_hh: (4H, H); pre-transpose.
    w_ih = jax.random.normal(ks[0], (4 * hidden, embed_len), jnp.float32) * s
    w_hh = jax.random.normal(ks[1], (4 * hidden, hidden), jnp.float32) * s
    b_ih = jax.random.normal(ks[2], (4 * hidden,), jnp.float32) * s
    b_hh = jax.random.normal(ks[3], (4 * hidden,), jnp.float32) * s
    w_cls = jax.random.normal(ks[4], (chi_dict_len, hidden), jnp.float32) * s
    b_cls = jax.random.normal(ks[5], (chi_dict_len,), jnp.float32) * s
    return {
        "w_ih": w_ih.T,                       # (E, 4H)
        "w_hh": w_hh.T,                       # (H, 4H)
        "b": (b_ih + b_hh)[None, :],          # (1, 4H)
        "w_cls": w_cls.T,                     # (H, C)
        "b_cls": b_cls[None, :],              # (1, C)
    }


def _reference(x, h0, c0, params):
    """Pure-JAX f32 reference of the same LSTM + Linear forward."""
    H = h0.shape[-1]
    h, c = h0[0], c0[0]
    outs = []
    for t in range(x.shape[1]):
        gates = x[:, t] @ params["w_ih"] + h @ params["w_hh"] + params["b"]
        i = jax.nn.sigmoid(gates[:, 0 * H:1 * H])
        f = jax.nn.sigmoid(gates[:, 1 * H:2 * H])
        g = jnp.tanh(gates[:, 2 * H:3 * H])
        o = jax.nn.sigmoid(gates[:, 3 * H:4 * H])
        c = f * c + i * g
        h = o * jnp.tanh(c)
        outs.append(h @ params["w_cls"] + params["b_cls"])
    return jnp.stack(outs, axis=1), (h[None], c[None])


if __name__ == "__main__":
    key = jax.random.PRNGKey(0)
    k_x, k_h, k_c, k_p = jax.random.split(key, 4)

    x = jax.random.normal(k_x, (BATCH, SEQ, EMBED_LEN), jnp.float32)
    h0 = jax.random.normal(k_h, (1, BATCH, HIDDEN_NUM), jnp.float32)
    c0 = jax.random.normal(k_c, (1, BATCH, HIDDEN_NUM), jnp.float32)
    params = init_params(k_p, EMBED_LEN, HIDDEN_NUM, CHI_DICT_LEN)

    fwd = jax.jit(decoder_forward)
    pre, (h_n, c_n) = fwd(x, h0, c0, params)
    jax.block_until_ready((pre, h_n, c_n))

    # Sanity check against pure-JAX f32 reference. Tolerance relaxed (per perf
    # review) because the recurrent matmul runs bf16-in / f32-accumulate.
    pre_ref, (h_ref, c_ref) = _reference(x, h0, c0, params)
    assert pre.shape == (BATCH, SEQ, CHI_DICT_LEN)
    assert h_n.shape == (1, BATCH, HIDDEN_NUM) and c_n.shape == (1, BATCH, HIDDEN_NUM)
    assert jnp.allclose(pre, pre_ref, atol=5e-2)
    assert jnp.allclose(h_n, h_ref, atol=5e-2)
    assert jnp.allclose(c_n, c_ref, atol=5e-2)

    print("KERNEL_OK")
</pallas_src>

<mosaic_0001>
module attributes {stable_mosaic.version = 11 : i64} {
  func.func @decoder_kernel(%arg0: memref<16x16xf32, #tpu.memory_space<vmem>>, %arg1: memref<16x128xf32, #tpu.memory_space<vmem>>, %arg2: memref<32x128xf32, #tpu.memory_space<vmem>>, %arg3: memref<1x128xf32, #tpu.memory_space<vmem>>, %arg4: memref<2x32xf32, #tpu.memory_space<vmem>>, %arg5: memref<2x32xf32, #tpu.memory_space<vmem>>, %arg6: memref<32x64xf32, #tpu.memory_space<vmem>>, %arg7: memref<1x64xf32, #tpu.memory_space<vmem>>, %arg8: memref<16x64xf32, #tpu.memory_space<vmem>>, %arg9: memref<2x32xf32, #tpu.memory_space<vmem>>, %arg10: memref<2x32xf32, #tpu.memory_space<vmem>>, %arg11: memref<16x128xf32, #tpu.memory_space<vmem>>, %arg12: memref<16x32xf32, #tpu.memory_space<vmem>>) attributes {dimension_semantics = [], scalar_prefetch = 0 : i64, scratch_operands = 2 : i64, tpu.core_type = #tpu.core_type<tc>} {
    %c0 = arith.constant 0 : index
    %c0_0 = arith.constant 0 : index
    %0 = vector.load %arg0[%c0, %c0_0] : memref<16x16xf32, #tpu.memory_space<vmem>>, vector<16x16xf32>
    %c0_1 = arith.constant 0 : index
    %c0_2 = arith.constant 0 : index
    %1 = vector.load %arg1[%c0_1, %c0_2] : memref<16x128xf32, #tpu.memory_space<vmem>>, vector<16x128xf32>
    %cst = arith.constant dense<0.000000e+00> : vector<16x128xf32>
    %2 = tpu.matmul %0, %1, %cst {dimension_numbers = #tpu.dot_dimension_numbers<[1], [0], [0], [1], [0, 0, 1, 1], [], []>} : vector<16x16xf32>, vector<16x128xf32>, vector<16x128xf32> -> vector<16x128xf32>
    %c0_3 = arith.constant 0 : index
    %c0_4 = arith.constant 0 : index
    %3 = vector.load %arg3[%c0_3, %c0_4] : memref<1x128xf32, #tpu.memory_space<vmem>>, vector<1x128xf32>
    %4 = vector.broadcast %3 : vector<1x128xf32> to vector<16x128xf32>
    %5 = arith.addf %2, %4 : vector<16x128xf32>
    %c0_5 = arith.constant 0 : index
    %c0_6 = arith.constant 0 : index
    %6 = vector.load %arg11[%c0_5, %c0_6] : memref<16x128xf32, #tpu.memory_space<vmem>>, vector<16x128xf32>
    tpu.vector_store %arg11[%c0_5, %c0_6], %5 {strides = array<i32>} : memref<16x128xf32, #tpu.memory_space<vmem>>, vector<16x128xf32>,
    %c0_7 = arith.constant 0 : index
    %c0_8 = arith.constant 0 : index
    %7 = vector.load %arg2[%c0_7, %c0_8] : memref<32x128xf32, #tpu.memory_space<vmem>>, vector<32x128xf32>
    %8 = arith.truncf %7 : vector<32x128xf32> to vector<32x128xbf16>
    %c0_9 = arith.constant 0 : index
    %c0_10 = arith.constant 0 : index
    %9 = vector.load %arg4[%c0_9, %c0_10] : memref<2x32xf32, #tpu.memory_space<vmem>>, vector<2x32xf32>
    %c0_11 = arith.constant 0 : index
    %c0_12 = arith.constant 0 : index
    %10 = vector.load %arg5[%c0_11, %c0_12] : memref<2x32xf32, #tpu.memory_space<vmem>>, vector<2x32xf32>
    %c0_13 = arith.constant 0 : index
    %c0_14 = arith.constant 0 : index
    %11 = vector.load %arg11[%c0_13, %c0_14] : memref<16x128xf32, #tpu.memory_space<vmem>>, vector<2x128xf32>
    %12 = arith.truncf %9 : vector<2x32xf32> to vector<2x32xbf16>
    %cst_15 = arith.constant dense<0.000000e+00> : vector<2x128xf32>
    %13 = tpu.matmul %12, %8, %cst_15 {dimension_numbers = #tpu.dot_dimension_numbers<[1], [0], [0], [1], [0, 0, 1, 1], [], []>} : vector<2x32xbf16>, vector<32x128xbf16>, vector<2x128xf32> -> vector<2x128xf32>
    %14 = arith.addf %11, %13 : vector<2x128xf32>
    %cst_16 = arith.constant 5.000000e-01 : f32
    %15 = vector.broadcast %cst_16 : f32 to vector<2x128xf32>
    %16 = arith.mulf %15, %14 : vector<2x128xf32>
    %17 = math.tanh %16 : vector<2x128xf32>
    %cst_17 = arith.constant 5.000000e-01 : f32
    %18 = vector.broadcast %cst_17 : f32 to vector<2x128xf32>
    %19 = arith.mulf %18, %17 : vector<2x128xf32>
    %cst_18 = arith.constant 5.000000e-01 : f32
    %20 = vector.broadcast %cst_18 : f32 to vector<2x128xf32>
    %21 = arith.addf %19, %20 : vector<2x128xf32>
    %22 = math.tanh %14 : vector<2x128xf32>
    %23 = vector.extract_strided_slice %21 {offsets = [0, 0], sizes = [2, 32], strides = [1, 1]} : vector<2x128xf32> to vector<2x32xf32>
    %24 = vector.extract_strided_slice %21 {offsets = [0, 32], sizes = [2, 32], strides = [1, 1]} : vector<2x128xf32> to vector<2x32xf32>
    %25 = vector.extract_strided_slice %22 {offsets = [0, 64], sizes = [2, 32], strides = [1, 1]} : vector<2x128xf32> to vector<2x32xf32>
    %26 = vector.extract_strided_slice %21 {offsets = [0, 96], sizes = [2, 32], strides = [1, 1]} : vector<2x128xf32> to vector<2x32xf32>
    %27 = arith.mulf %24, %10 : vector<2x32xf32>
    %28 = arith.mulf %23, %25 : vector<2x32xf32>
    %29 = arith.addf %27, %28 : vector<2x32xf32>
    %30 = math.tanh %29 : vector<2x32xf32>
    %31 = arith.mulf %26, %30 : vector<2x32xf32>
    %c0_19 = arith.constant 0 : index
    %c0_20 = arith.constant 0 : index
    %32 = vector.load %arg12[%c0_19, %c0_20] : memref<16x32xf32, #tpu.memory_space<vmem>>, vector<2x32xf32>
    tpu.vector_store %arg12[%c0_19, %c0_20], %31 {strides = array<i32>} : memref<16x32xf32, #tpu.memory_space<vmem>>, vector<2x32xf32>,
    %c2 = arith.constant 2 : index
    %c0_21 = arith.constant 0 : index
    %33 = vector.load %arg11[%c2, %c0_21] : memref<16x128xf32, #tpu.memory_space<vmem>>, vector<2x128xf32>
    %34 = arith.truncf %31 : vector<2x32xf32> to vector<2x32xbf16>
    %cst_22 = arith.constant dense<0.000000e+00> : vector<2x128xf32>
    %35 = tpu.matmul %34, %8, %cst_22 {dimension_numbers = #tpu.dot_dimension_numbers<[1], [0], [0], [1], [0, 0, 1, 1], [], []>} : vector<2x32xbf16>, vector<32x128xbf16>, vector<2x128xf32> -> vector<2x128xf32>
    %36 = arith.addf %33, %35 : vector<2x128xf32>
    %cst_23 = arith.constant 5.000000e-01 : f32
    %37 = vector.broadcast %cst_23 : f32 to vector<2x128xf32>
    %38 = arith.mulf %37, %36 : vector<2x128xf32>
    %39 = math.tanh %38 : vector<2x128xf32>
    %cst_24 = arith.constant 5.000000e-01 : f32
    %40 = vector.broadcast %cst_24 : f32 to vector<2x128xf32>
    %41 = arith.mulf %40, %39 : vector<2x128xf32>
    %cst_25 = arith.constant 5.000000e-01 : f32
    %42 = vector.broadcast %cst_25 : f32 to vector<2x128xf32>
    %43 = arith.addf %41, %42 : vector<2x128xf32>
    %44 = math.tanh %36 : vector<2x128xf32>
    %45 = vector.extract_strided_slice %43 {offsets = [0, 0], sizes = [2, 32], strides = [1, 1]} : vector<2x128xf32> to vector<2x32xf32>
    %46 = vector.extract_strided_slice %43 {offsets = [0, 32], sizes = [2, 32], strides = [1, 1]} : vector<2x128xf32> to vector<2x32xf32>
    %47 = vector.extract_strided_slice %44 {offsets = [0, 64], sizes = [2, 32], strides = [1, 1]} : vector<2x128xf32> to vector<2x32xf32>
    %48 = vector.extract_strided_slice %43 {offsets = [0, 96], sizes = [2, 32], strides = [1, 1]} : vector<2x128xf32> to vector<2x32xf32>
    %49 = arith.mulf %46, %29 : vector<2x32xf32>
    %50 = arith.mulf %45, %47 : vector<2x32xf32>
    %51 = arith.addf %49, %50 : vector<2x32xf32>
    %52 = math.tanh %51 : vector<2x32xf32>
    %53 = arith.mulf %48, %52 : vector<2x32xf32>
    %c2_26 = arith.constant 2 : index
    %c0_27 = arith.constant 0 : index
    %54 = vector.load %arg12[%c2_26, %c0_27] : memref<16x32xf32, #tpu.memory_space<vmem>>, vector<2x32xf32>
    tpu.vector_store %arg12[%c2_26, %c0_27], %53 {strides = array<i32>} : memref<16x32xf32, #tpu.memory_space<vmem>>, vector<2x32xf32>,
    %c4 = arith.constant 4 : index
    %c0_28 = arith.constant 0 : index
    %55 = vector.load %arg11[%c4, %c0_28] : memref<16x128xf32, #tpu.memory_space<vmem>>, vector<2x128xf32>
    %56 = arith.truncf %53 : vector<2x32xf32> to vector<2x32xbf16>
    %cst_29 = arith.constant dense<0.000000e+00> : vector<2x128xf32>
    %57 = tpu.matmul %56, %8, %cst_29 {dimension_numbers = #tpu.dot_dimension_numbers<[1], [0], [0], [1], [0, 0, 1, 1], [], []>} : vector<2x32xbf16>, vector<32x128xbf16>, vector<2x128xf32> -> vector<2x128xf32>
    %58 = arith.addf %55, %57 : vector<2x128xf32>
    %cst_30 = arith.constant 5.000000e-01 : f32
    %59 = vector.broadcast %cst_30 : f32 to vector<2x128xf32>
    %60 = arith.mulf %59, %58 : vector<2x128xf32>
    %61 = math.tanh %60 : vector<2x128xf32>
    %cst_31 = arith.constant 5.000000e-01 : f32
    %62 = vector.broadcast %cst_31 : f32 to vector<2x128xf32>
    %63 = arith.mulf %62, %61 : vector<2x128xf32>
    %cst_32 = arith.constant 5.000000e-01 : f32
    %64 = vector.broadcast %cst_32 : f32 to vector<2x128xf32>
    %65 = arith.addf %63, %64 : vector<2x128xf32>
    %66 = math.tanh %58 : vector<2x128xf32>
    %67 = vector.extract_strided_slice %65 {offsets = [0, 0], sizes = [2, 32], strides = [1, 1]} : vector<2x128xf32> to vector<2x32xf32>
    %68 = vector.extract_strided_slice %65 {offsets = [0, 32], sizes = [2, 32], strides = [1, 1]} : vector<2x128xf32> to vector<2x32xf32>
    %69 = vector.extract_strided_slice %66 {offsets = [0, 64], sizes = [2, 32], strides = [1, 1]} : vector<2x128xf32> to vector<2x32xf32>
    %70 = vector.extract_strided_slice %65 {offsets = [0, 96], sizes = [2, 32], strides = [1, 1]} : vector<2x128xf32> to vector<2x32xf32>
    %71 = arith.mulf %68, %51 : vector<2x32xf32>
    %72 = arith.mulf %67, %69 : vector<2x32xf32>
    %73 = arith.addf %71, %72 : vector<2x32xf32>
    %74 = math.tanh %73 : vector<2x32xf32>
    %75 = arith.mulf %70, %74 : vector<2x32xf32>
    %c4_33 = arith.constant 4 : index
    %c0_34 = arith.constant 0 : index
    %76 = vector.load %arg12[%c4_33, %c0_34] : memref<16x32xf32, #tpu.memory_space<vmem>>, vector<2x32xf32>
    tpu.vector_store %arg12[%c4_33, %c0_34], %75 {strides = array<i32>} : memref<16x32xf32, #tpu.memory_space<vmem>>, vector<2x32xf32>,
    %c6 = arith.constant 6 : index
    %c0_35 = arith.constant 0 : index
    %77 = vector.load %arg11[%c6, %c0_35] : memref<16x128xf32, #tpu.memory_space<vmem>>, vector<2x128xf32>
    %78 = arith.truncf %75 : vector<2x32xf32> to vector<2x32xbf16>
    %cst_36 = arith.constant dense<0.000000e+00> : vector<2x128xf32>
    %79 = tpu.matmul %78, %8, %cst_36 {dimension_numbers = #tpu.dot_dimension_numbers<[1], [0], [0], [1], [0, 0, 1, 1], [], []>} : vector<2x32xbf16>, vector<32x128xbf16>, vector<2x128xf32> -> vector<2x128xf32>
    %80 = arith.addf %77, %79 : vector<2x128xf32>
    %cst_37 = arith.constant 5.000000e-01 : f32
    %81 = vector.broadcast %cst_37 : f32 to vector<2x128xf32>
    %82 = arith.mulf %81, %80 : vector<2x128xf32>
    %83 = math.tanh %82 : vector<2x128xf32>
    %cst_38 = arith.constant 5.000000e-01 : f32
    %84 = vector.broadcast %cst_38 : f32 to vector<2x128xf32>
    %85 = arith.mulf %84, %83 : vector<2x128xf32>
    %cst_39 = arith.constant 5.000000e-01 : f32
    %86 = vector.broadcast %cst_39 : f32 to vector<2x128xf32>
    %87 = arith.addf %85, %86 : vector<2x128xf32>
    %88 = math.tanh %80 : vector<2x128xf32>
    %89 = vector.extract_strided_slice %87 {offsets = [0, 0], sizes = [2, 32], strides = [1, 1]} : vector<2x128xf32> to vector<2x32xf32>
    %90 = vector.extract_strided_slice %87 {offsets = [0, 32], sizes = [2, 32], strides = [1, 1]} : vector<2x128xf32> to vector<2x32xf32>
    %91 = vector.extract_strided_slice %88 {offsets = [0, 64], sizes = [2, 32], strides = [1, 1]} : vector<2x128xf32> to vector<2x32xf32>
    %92 = vector.extract_strided_slice %87 {offsets = [0, 96], sizes = [2, 32], strides = [1, 1]} : vector<2x128xf32> to vector<2x32xf32>
    %93 = arith.mulf %90, %73 : vector<2x32xf32>
    %94 = arith.mulf %89, %91 : vector<2x32xf32>
    %95 = arith.addf %93, %94 : vector<2x32xf32>
    %96 = math.tanh %95 : vector<2x32xf32>
    %97 = arith.mulf %92, %96 : vector<2x32xf32>
    %c6_40 = arith.constant 6 : index
    %c0_41 = arith.constant 0 : index
    %98 = vector.load %arg12[%c6_40, %c0_41] : memref<16x32xf32, #tpu.memory_space<vmem>>, vector<2x32xf32>
    tpu.vector_store %arg12[%c6_40, %c0_41], %97 {strides = array<i32>} : memref<16x32xf32, #tpu.memory_space<vmem>>, vector<2x32xf32>,
    %c8 = arith.constant 8 : index
    %c0_42 = arith.constant 0 : index
    %99 = vector.load %arg11[%c8, %c0_42] : memref<16x128xf32, #tpu.memory_space<vmem>>, vector<2x128xf32>
    %100 = arith.truncf %97 : vector<2x32xf32> to vector<2x32xbf16>
    %cst_43 = arith.constant dense<0.000000e+00> : vector<2x128xf32>
    %101 = tpu.matmul %100, %8, %cst_43 {dimension_numbers = #tpu.dot_dimension_numbers<[1], [0], [0], [1], [0, 0, 1, 1], [], []>} : vector<2x32xbf16>, vector<32x128xbf16>, vector<2x128xf32> -> vector<2x128xf32>
    %102 = arith.addf %99, %101 : vector<2x128xf32>
    %cst_44 = arith.constant 5.000000e-01 : f32
    %103 = vector.broadcast %cst_44 : f32 to vector<2x128xf32>
    %104 = arith.mulf %103, %102 : vector<2x128xf32>
    %105 = math.tanh %104 : vector<2x128xf32>
    %cst_45 = arith.constant 5.000000e-01 : f32
    %106 = vector.broadcast %cst_45 : f32 to vector<2x128xf32>
    %107 = arith.mulf %106, %105 : vector<2x128xf32>
    %cst_46 = arith.constant 5.000000e-01 : f32
    %108 = vector.broadcast %cst_46 : f32 to vector<2x128xf32>
    %109 = arith.addf %107, %108 : vector<2x128xf32>
    %110 = math.tanh %102 : vector<2x128xf32>
    %111 = vector.extract_strided_slice %109 {offsets = [0, 0], sizes = [2, 32], strides = [1, 1]} : vector<2x128xf32> to vector<2x32xf32>
    %112 = vector.extract_strided_slice %109 {offsets = [0, 32], sizes = [2, 32], strides = [1, 1]} : vector<2x128xf32> to vector<2x32xf32>
    %113 = vector.extract_strided_slice %110 {offsets = [0, 64], sizes = [2, 32], strides = [1, 1]} : vector<2x128xf32> to vector<2x32xf32>
    %114 = vector.extract_strided_slice %109 {offsets = [0, 96], sizes = [2, 32], strides = [1, 1]} : vector<2x128xf32> to vector<2x32xf32>
    %115 = arith.mulf %112, %95 : vector<2x32xf32>
    %116 = arith.mulf %111, %113 : vector<2x32xf32>
    %117 = arith.addf %115, %116 : vector<2x32xf32>
    %118 = math.tanh %117 : vector<2x32xf32>
    %119 = arith.mulf %114, %118 : vector<2x32xf32>
    %c8_47 = arith.constant 8 : index
    %c0_48 = arith.constant 0 : index
    %120 = vector.load %arg12[%c8_47, %c0_48] : memref<16x32xf32, #tpu.memory_space<vmem>>, vector<2x32xf32>
    tpu.vector_store %arg12[%c8_47, %c0_48], %119 {strides = array<i32>} : memref<16x32xf32, #tpu.memory_space<vmem>>, vector<2x32xf32>,
    %c10 = arith.constant 10 : index
    %c0_49 = arith.constant 0 : index
    %121 = vector.load %arg11[%c10, %c0_49] : memref<16x128xf32, #tpu.memory_space<vmem>>, vector<2x128xf32>
    %122 = arith.truncf %119 : vector<2x32xf32> to vector<2x32xbf16>
    %cst_50 = arith.constant dense<0.000000e+00> : vector<2x128xf32>
    %123 = tpu.matmul %122, %8, %cst_50 {dimension_numbers = #tpu.dot_dimension_numbers<[1], [0], [0], [1], [0, 0, 1, 1], [], []>} : vector<2x32xbf16>, vector<32x128xbf16>, vector<2x128xf32> -> vector<2x128xf32>
    %124 = arith.addf %121, %123 : vector<2x128xf32>
    %cst_51 = arith.constant 5.000000e-01 : f32
    %125 = vector.broadcast %cst_51 : f32 to vector<2x128xf32>
    %126 = arith.mulf %125, %124 : vector<2x128xf32>
    %127 = math.tanh %126 : vector<2x128xf32>
    %cst_52 = arith.constant 5.000000e-01 : f32
    %128 = vector.broadcast %cst_52 : f32 to vector<2x128xf32>
    %129 = arith.mulf %128, %127 : vector<2x128xf32>
    %cst_53 = arith.constant 5.000000e-01 : f32
    %130 = vector.broadcast %cst_53 : f32 to vector<2x128xf32>
    %131 = arith.addf %129, %130 : vector<2x128xf32>
    %132 = math.tanh %124 : vector<2x128xf32>
    %133 = vector.extract_strided_slice %131 {offsets = [0, 0], sizes = [2, 32], strides = [1, 1]} : vector<2x128xf32> to vector<2x32xf32>
    %134 = vector.extract_strided_slice %131 {offsets = [0, 32], sizes = [2, 32], strides = [1, 1]} : vector<2x128xf32> to vector<2x32xf32>
    %135 = vector.extract_strided_slice %132 {offsets = [0, 64], sizes = [2, 32], strides = [1, 1]} : vector<2x128xf32> to vector<2x32xf32>
    %136 = vector.extract_strided_slice %131 {offsets = [0, 96], sizes = [2, 32], strides = [1, 1]} : vector<2x128xf32> to vector<2x32xf32>
    %137 = arith.mulf %134, %117 : vector<2x32xf32>
    %138 = arith.mulf %133, %135 : vector<2x32xf32>
    %139 = arith.addf %137, %138 : vector<2x32xf32>
    %140 = math.tanh %139 : vector<2x32xf32>
    %141 = arith.mulf %136, %140 : vector<2x32xf32>
    %c10_54 = arith.constant 10 : index
    %c0_55 = arith.constant 0 : index
    %142 = vector.load %arg12[%c10_54, %c0_55] : memref<16x32xf32, #tpu.memory_space<vmem>>, vector<2x32xf32>
    tpu.vector_store %arg12[%c10_54, %c0_55], %141 {strides = array<i32>} : memref<16x32xf32, #tpu.memory_space<vmem>>, vector<2x32xf32>,
    %c12 = arith.constant 12 : index
    %c0_56 = arith.constant 0 : index
    %143 = vector.load %arg11[%c12, %c0_56] : memref<16x128xf32, #tpu.memory_space<vmem>>, vector<2x128xf32>
    %144 = arith.truncf %141 : vector<2x32xf32> to vector<2x32xbf16>
    %cst_57 = arith.constant dense<0.000000e+00> : vector<2x128xf32>
    %145 = tpu.matmul %144, %8, %cst_57 {dimension_numbers = #tpu.dot_dimension_numbers<[1], [0], [0], [1], [0, 0, 1, 1], [], []>} : vector<2x32xbf16>, vector<32x128xbf16>, vector<2x128xf32> -> vector<2x128xf32>
    %146 = arith.addf %143, %145 : vector<2x128xf32>
    %cst_58 = arith.constant 5.000000e-01 : f32
    %147 = vector.broadcast %cst_58 : f32 to vector<2x128xf32>
    %148 = arith.mulf %147, %146 : vector<2x128xf32>
    %149 = math.tanh %148 : vector<2x128xf32>
    %cst_59 = arith.constant 5.000000e-01 : f32
    %150 = vector.broadcast %cst_59 : f32 to vector<2x128xf32>
    %151 = arith.mulf %150, %149 : vector<2x128xf32>
    %cst_60 = arith.constant 5.000000e-01 : f32
    %152 = vector.broadcast %cst_60 : f32 to vector<2x128xf32>
    %153 = arith.addf %151, %152 : vector<2x128xf32>
    %154 = math.tanh %146 : vector<2x128xf32>
    %155 = vector.extract_strided_slice %153 {offsets = [0, 0], sizes = [2, 32], strides = [1, 1]} : vector<2x128xf32> to vector<2x32xf32>
    %156 = vector.extract_strided_slice %153 {offsets = [0, 32], sizes = [2, 32], strides = [1, 1]} : vector<2x128xf32> to vector<2x32xf32>
    %157 = vector.extract_strided_slice %154 {offsets = [0, 64], sizes = [2, 32], strides = [1, 1]} : vector<2x128xf32> to vector<2x32xf32>
    %158 = vector.extract_strided_slice %153 {offsets = [0, 96], sizes = [2, 32], strides = [1, 1]} : vector<2x128xf32> to vector<2x32xf32>
    %159 = arith.mulf %156, %139 : vector<2x32xf32>
    %160 = arith.mulf %155, %157 : vector<2x32xf32>
    %161 = arith.addf %159, %160 : vector<2x32xf32>
    %162 = math.tanh %161 : vector<2x32xf32>
    %163 = arith.mulf %158, %162 : vector<2x32xf32>
    %c12_61 = arith.constant 12 : index
    %c0_62 = arith.constant 0 : index
    %164 = vector.load %arg12[%c12_61, %c0_62] : memref<16x32xf32, #tpu.memory_space<vmem>>, vector<2x32xf32>
    tpu.vector_store %arg12[%c12_61, %c0_62], %163 {strides = array<i32>} : memref<16x32xf32, #tpu.memory_space<vmem>>, vector<2x32xf32>,
    %c14 = arith.constant 14 : index
    %c0_63 = arith.constant 0 : index
    %165 = vector.load %arg11[%c14, %c0_63] : memref<16x128xf32, #tpu.memory_space<vmem>>, vector<2x128xf32>
    %166 = arith.truncf %163 : vector<2x32xf32> to vector<2x32xbf16>
    %cst_64 = arith.constant dense<0.000000e+00> : vector<2x128xf32>
    %167 = tpu.matmul %166, %8, %cst_64 {dimension_numbers = #tpu.dot_dimension_numbers<[1], [0], [0], [1], [0, 0, 1, 1], [], []>} : vector<2x32xbf16>, vector<32x128xbf16>, vector<2x128xf32> -> vector<2x128xf32>
    %168 = arith.addf %165, %167 : vector<2x128xf32>
    %cst_65 = arith.constant 5.000000e-01 : f32
    %169 = vector.broadcast %cst_65 : f32 to vector<2x128xf32>
    %170 = arith.mulf %169, %168 : vector<2x128xf32>
    %171 = math.tanh %170 : vector<2x128xf32>
    %cst_66 = arith.constant 5.000000e-01 : f32
    %172 = vector.broadcast %cst_66 : f32 to vector<2x128xf32>
    %173 = arith.mulf %172, %171 : vector<2x128xf32>
    %cst_67 = arith.constant 5.000000e-01 : f32
    %174 = vector.broadcast %cst_67 : f32 to vector<2x128xf32>
    %175 = arith.addf %173, %174 : vector<2x128xf32>
    %176 = math.tanh %168 : vector<2x128xf32>
    %177 = vector.extract_strided_slice %175 {offsets = [0, 0], sizes = [2, 32], strides = [1, 1]} : vector<2x128xf32> to vector<2x32xf32>
    %178 = vector.extract_strided_slice %175 {offsets = [0, 32], sizes = [2, 32], strides = [1, 1]} : vector<2x128xf32> to vector<2x32xf32>
    %179 = vector.extract_strided_slice %176 {offsets = [0, 64], sizes = [2, 32], strides = [1, 1]} : vector<2x128xf32> to vector<2x32xf32>
    %180 = vector.extract_strided_slice %175 {offsets = [0, 96], sizes = [2, 32], strides = [1, 1]} : vector<2x128xf32> to vector<2x32xf32>
    %181 = arith.mulf %178, %161 : vector<2x32xf32>
    %182 = arith.mulf %177, %179 : vector<2x32xf32>
    %183 = arith.addf %181, %182 : vector<2x32xf32>
    %184 = math.tanh %183 : vector<2x32xf32>
    %185 = arith.mulf %180, %184 : vector<2x32xf32>
    %c14_68 = arith.constant 14 : index
    %c0_69 = arith.constant 0 : index
    %186 = vector.load %arg12[%c14_68, %c0_69] : memref<16x32xf32, #tpu.memory_space<vmem>>, vector<2x32xf32>
    tpu.vector_store %arg12[%c14_68, %c0_69], %185 {strides = array<i32>} : memref<16x32xf32, #tpu.memory_space<vmem>>, vector<2x32xf32>,
    %c0_70 = arith.constant 0 : index
    %c0_71 = arith.constant 0 : index
    %187 = vector.load %arg12[%c0_70, %c0_71] : memref<16x32xf32, #tpu.memory_space<vmem>>, vector<16x32xf32>
    %c0_72 = arith.constant 0 : index
    %c0_73 = arith.constant 0 : index
    %188 = vector.load %arg6[%c0_72, %c0_73] : memref<32x64xf32, #tpu.memory_space<vmem>>, vector<32x64xf32>
    %cst_74 = arith.constant dense<0.000000e+00> : vector<16x64xf32>
    %189 = tpu.matmul %187, %188, %cst_74 {dimension_numbers = #tpu.dot_dimension_numbers<[1], [0], [0], [1], [0, 0, 1, 1], [], []>} : vector<16x32xf32>, vector<32x64xf32>, vector<16x64xf32> -> vector<16x64xf32>
    %c0_75 = arith.constant 0 : index
    %c0_76 = arith.constant 0 : index
    %190 = vector.load %arg7[%c0_75, %c0_76] : memref<1x64xf32, #tpu.memory_space<vmem>>, vector<1x64xf32>
    %191 = vector.broadcast %190 : vector<1x64xf32> to vector<16x64xf32>
    %192 = arith.addf %189, %191 : vector<16x64xf32>
    %c0_77 = arith.constant 0 : index
    %c0_78 = arith.constant 0 : index
    %193 = vector.load %arg8[%c0_77, %c0_78] : memref<16x64xf32, #tpu.memory_space<vmem>>, vector<16x64xf32>
    tpu.vector_store %arg8[%c0_77, %c0_78], %192 {strides = array<i32>} : memref<16x64xf32, #tpu.memory_space<vmem>>, vector<16x64xf32>,
    %c0_79 = arith.constant 0 : index
    %c0_80 = arith.constant 0 : index
    %194 = vector.load %arg9[%c0_79, %c0_80] : memref<2x32xf32, #tpu.memory_space<vmem>>, vector<2x32xf32>
    tpu.vector_store %arg9[%c0_79, %c0_80], %185 {strides = array<i32>} : memref<2x32xf32, #tpu.memory_space<vmem>>, vector<2x32xf32>,
    %c0_81 = arith.constant 0 : index
    %c0_82 = arith.constant 0 : index
    %195 = vector.load %arg10[%c0_81, %c0_82] : memref<2x32xf32, #tpu.memory_space<vmem>>, vector<2x32xf32>
    tpu.vector_store %arg10[%c0_81, %c0_82], %183 {strides = array<i32>} : memref<2x32xf32, #tpu.memory_space<vmem>>, vector<2x32xf32>,
    return
  }
}

</mosaic_0001>

<llo_original>
// kernel: decoder_forward.1
$region0: #{decoder_forward.1}
  #allocation0 [shape = 'u32[]', space=smem, size = 0x4, offset = 0x4, fixed_abs, tag = 'smem constant byte address 0x4 - core index']
  #allocation1 [shape = 'u32[144,128]{1,0:T(1,128)}', space=vmem, size = 0x12000, scoped, tag = 'internal scratch']
  #allocation2 [shape = 'f32[16,128]{1,0:T(8,128)}', space=vmem, size = 0x2000, scoped, tag = 'scratch operand']
  #allocation3 [shape = 'f32[16,32]{1,0:T(8,128)}', space=vmem, size = 0x2000, scoped, tag = 'scratch operand']
  %s0 = inlined_call_operand.vmem [shape: f32[16,16], index: 0, kind: input, shape index: {}]
  %s1 = inlined_call_operand.hbm [shape: f32[16,128], index: 1, kind: input, shape index: {}]
  %s2 = inlined_call_operand.vmem [shape: f32[32,128], index: 2, kind: input, shape index: {}]
  %s3 = inlined_call_operand.hbm [shape: f32[1,128], index: 3, kind: input, shape index: {}]
  %s4 = inlined_call_operand.vmem [shape: f32[2,32], index: 4, kind: input, shape index: {}]
  %s5 = inlined_call_operand.hbm [shape: f32[2,32], index: 5, kind: input, shape index: {}]
  %s6 = inlined_call_operand.vmem [shape: f32[32,64], index: 6, kind: input, shape index: {}]
  %s7 = inlined_call_operand.hbm [shape: f32[1,64], index: 7, kind: input, shape index: {}]
  %s8 = inlined_call_operand.vmem [shape: f32[16,64], index: 8, kind: output, shape index: {0}]
  %s9 = inlined_call_operand.hbm [shape: f32[2,32], index: 9, kind: output, shape index: {1}]
  %s10 = inlined_call_operand.hbm [shape: f32[2,32], index: 10, kind: output, shape index: {2}]
  %11 = xla_tuple %s8, %s9, %s10
  %s12 = sld [smem:[#allocation0]]
  $region74: #{decoder_forward.1} parent=0
    _
  %s14 = ssub.s32 1, %s12
  %s15 = scalar_select 0, %s14, %s12
  $region1: #{decoder_forward.1} parent=0
    #allocation4 [shape = 'u8[8192]{0}', space=vmem, size = 0x2000, scoped, tag = 'input window, operand 1, single buffered']
    #allocation5 [shape = 's32[1]{0}', space=sflag, size = 0x4, scoped, tag = 'scoped memory for decoder_forward.1']
    #allocation6 [shape = 's32[1]{0}', space=sflag, size = 0x4, scoped, tag = 'scoped memory for decoder_forward.1']
    #allocation7 [shape = 'u8[512]{0}', space=vmem, size = 0x400, scoped, tag = 'input window, operand 3, single buffered']
    #allocation8 [shape = 's32[1]{0}', space=sflag, size = 0x4, scoped, tag = 'scoped memory for decoder_forward.1']
    #allocation9 [shape = 'u8[1024]{0}', space=vmem, size = 0x400, scoped, tag = 'input window, operand 5, single buffered']
    #allocation10 [shape = 'u8[512]{0}', space=vmem, size = 0x400, scoped, tag = 'input window, operand 7, single buffered']
    #allocation11 [shape = 's32[1]{0}', space=sflag, size = 0x4, scoped, tag = 'scoped memory for decoder_forward.1']
    #allocation12 [shape = 'u8[1024]{0}', space=vmem, size = 0x400, scoped, tag = 'output window, operand 1, single buffered']
    #allocation13 [shape = 'u8[1024]{0}', space=vmem, size = 0x400, scoped, tag = 'output window, operand 2, single buffered']
    #allocation14 [shape = 's32[1]{0}', space=sflag, size = 0x4, scoped, tag = 'scoped memory for decoder_forward.1']
    %16 = vsyncpa [#allocation5], 0
    %17 = vsyncpa [#allocation8], 0
    %18 = vsyncpa [#allocation11], 0
    %19 = vsyncpa [#allocation6], 0
    %20 = vsyncpa [#allocation14], 0
    // Predicated region
    $region2: #{decoder_forward.1} parent=1 // pred_check
      _
    $region3: #{decoder_forward.1} parent=1 // pred_check_branch
      %22 = sbr.rel (0) target = $region5
    $region4: #{decoder_forward.1} parent=1 // pred_region
      _
    $region5: #{decoder_forward.1} parent=1 // pred_fallthru
      _
    // Predicated region
    $region6: #{decoder_forward.1} parent=1 // pred_check
      _
    $region7: #{decoder_forward.1} parent=1 // pred_check_branch
      %24 = sbr.rel (0) target = $region9
    $region8: #{decoder_forward.1} parent=1 // pred_region
      %s26 = ssub.s32 256, 256
      %27 = vsyncadd [#allocation5], %s26
      %s28 = sshll.u32 [#allocation4], 4
      %s29 = int_to_ptr.vmem [resolvable:$true] %s28
      %34 = dma.hbm_to_vmem [thread:$0]  %s1, 256, %s29, [#allocation5], 128, 128, 8
    $region9: #{decoder_forward.1} parent=1 // pred_fallthru
      _
    // Predicated region
    $region10: #{decoder_forward.1} parent=1 // pred_check
      _
    $region11: #{decoder_forward.1} parent=1 // pred_check_branch
      %36 = sbr.rel (0) target = $region13
    $region12: #{decoder_forward.1} parent=1 // pred_region
      _
    $region13: #{decoder_forward.1} parent=1 // pred_fallthru
      _
    // Predicated region
    $region14: #{decoder_forward.1} parent=1 // pred_check
      _
    $region15: #{decoder_forward.1} parent=1 // pred_check_branch
      %38 = sbr.rel (0) target = $region17
    $region16: #{decoder_forward.1} parent=1 // pred_region
      %s40 = ssub.s32 16, 16
      %41 = vsyncadd [#allocation8], %s40
      %s43 = sshll.u32 [#allocation7], 4
      %s44 = int_to_ptr.vmem [resolvable:$true] %s43
      %46 = dma.hbm_to_vmem [thread:$0]  %s3, 16, %s44, [#allocation8]
    $region17: #{decoder_forward.1} parent=1 // pred_fallthru
      _
    // Predicated region
    $region18: #{decoder_forward.1} parent=1 // pred_check
      _
    $region19: #{decoder_forward.1} parent=1 // pred_check_branch
      %48 = sbr.rel (0) target = $region21
    $region20: #{decoder_forward.1} parent=1 // pred_region
      _
    $region21: #{decoder_forward.1} parent=1 // pred_fallthru
      _
    // Predicated region
    $region22: #{decoder_forward.1} parent=1 // pred_check
      _
    $region23: #{decoder_forward.1} parent=1 // pred_check_branch
      %50 = sbr.rel (0) target = $region25
    $region24: #{decoder_forward.1} parent=1 // pred_region
      %s52 = ssub.s32 32, 32
      %53 = vsyncadd [#allocation8], %s52
      %s55 = sshll.u32 [#allocation9], 4
      %s56 = int_to_ptr.vmem [resolvable:$true] %s55
      %58 = dma.hbm_to_vmem [thread:$0]  %s5, 32, %s56, [#allocation8]
    $region25: #{decoder_forward.1} parent=1 // pred_fallthru
      _
    // Predicated region
    $region26: #{decoder_forward.1} parent=1 // pred_check
      _
    $region27: #{decoder_forward.1} parent=1 // pred_check_branch
      %60 = sbr.rel (0) target = $region29
    $region28: #{decoder_forward.1} parent=1 // pred_region
      _
    $region29: #{decoder_forward.1} parent=1 // pred_fallthru
      _
    // Predicated region
    $region30: #{decoder_forward.1} parent=1 // pred_check
      _
    $region31: #{decoder_forward.1} parent=1 // pred_check_branch
      %62 = sbr.rel (0) target = $region33
    $region32: #{decoder_forward.1} parent=1 // pred_region
      %s64 = ssub.s32 16, 16
      %65 = vsyncadd [#allocation11], %s64
      %s67 = sshll.u32 [#allocation10], 4
      %s68 = int_to_ptr.vmem [resolvable:$true] %s67
      %70 = dma.hbm_to_vmem [thread:$0]  %s7, 16, %s68, [#allocation11]
    $region33: #{decoder_forward.1} parent=1 // pred_fallthru
      _
    // Predicated region
    $region34: #{decoder_forward.1} parent=1 // pred_check
      _
    $region35: #{decoder_forward.1} parent=1 // pred_check_branch
      %72 = sbr.rel (0) target = $region37
    $region36: #{decoder_forward.1} parent=1 // pred_region
      %73 = dma.done [#allocation5], 256
    $region37: #{decoder_forward.1} parent=1 // pred_fallthru
      _
    // Predicated region
    $region38: #{decoder_forward.1} parent=1 // pred_check
      _
    $region39: #{decoder_forward.1} parent=1 // pred_check_branch
      %75 = sbr.rel (0) target = $region41
    $region40: #{decoder_forward.1} parent=1 // pred_region
      %76 = dma.done [#allocation8], 16
    $region41: #{decoder_forward.1} parent=1 // pred_fallthru
      _
    // Predicated region
    $region42: #{decoder_forward.1} parent=1 // pred_check
      _
    $region43: #{decoder_forward.1} parent=1 // pred_check_branch
      %78 = sbr.rel (0) target = $region45
    $region44: #{decoder_forward.1} parent=1 // pred_region
      %79 = dma.done [#allocation8], 32
    $region45: #{decoder_forward.1} parent=1 // pred_fallthru
      _
    // Predicated region
    $region46: #{decoder_forward.1} parent=1 // pred_check
      _
    $region47: #{decoder_forward.1} parent=1 // pred_check_branch
      %81 = sbr.rel (0) target = $region49
    $region48: #{decoder_forward.1} parent=1 // pred_region
      %82 = dma.done [#allocation11], 16
    $region49: #{decoder_forward.1} parent=1 // pred_fallthru
      _
    %v84 = vld [vmem:[%s0] sm:$0xff]
    %v85 = vld [vmem:[%s0 + $0x8] sm:$0xff]
    %v86 = vld [vmem:[#allocation4] sm:$0xff]
    %v87 = vld [vmem:[#allocation4 + $0x8] sm:$0xff]
    %v88 = vld [vmem:[#allocation7] sm:$0x1]
    %v90 = vlaneseq
    %v91 = vshrl.u32 %v90, 7
    %v92 = vsub.s32 0, %v91
    %v93 = vrot.slane %v88, %v92
    %vm95 = vcmask 130048
    %v97 = vsel %vm95, %v84, 0
    %v100 = vsel %vm95, %v85, 0
    %102 = vmatprep.subr.mxu0 0.0
    %103 = vmatpush1.msra.mxu0 %v86
    %104 = vmatprep.subr.mxu0 0.0
    %105 = vmatpush1.msra.mxu0 %v87
    %106 = vmatprep.subr.mxu0 0.0
    %107 = vmatpush1.msra.mxu0 0.0
    %108 = vmatprep.subr.mxu0 0.0
    %109 = vmatpush1.msra.mxu0 0.0
    %110 = vmatprep.subr.mxu0 0.0
    %111 = vmatpush1.msra.mxu0 0.0
    %112 = vmatprep.subr.mxu0 0.0
    %113 = vmatpush1.msra.mxu0 0.0
    %114 = vmatprep.subr.mxu0 0.0
    %115 = vmatpush1.msra.mxu0 0.0
    %116 = vmatprep.subr.mxu0 0.0
    %117 = vmatpush1.msra.mxu0 0.0
    %118 = vmatprep.subr.mxu0 0.0
    %119 = vmatpush1.msra.mxu0 0.0
    %120 = vmatprep.subr.mxu0 0.0
    %121 = vmatpush1.msra.mxu0 0.0
    %122 = vmatprep.subr.mxu0 0.0
    %123 = vmatpush1.msra.mxu0 0.0
    %124 = vmatprep.subr.mxu0 0.0
    %125 = vmatpush1.msra.mxu0 0.0
    %126 = vmatprep.subr.mxu0 0.0
    %127 = vmatpush1.msra.mxu0 0.0
    %128 = vmatprep.subr.mxu0 0.0
    %129 = vmatpush1.msra.mxu0 0.0
    %130 = vmatprep.subr.mxu0 0.0
    %131 = vmatpush1.msra.mxu0 0.0
    %132 = vmatprep.subr.mxu0 0.0
    %133 = vmatpush1.msra.mxu0 0.0
    %134 = vmatprep.subr.mxu0 0.0
    %135 = vmatpush1.msra.mxu0 0.0
    %136 = vmatprep.subr.mxu0 0.0
    %137 = vmatpush1.msra.mxu0 0.0
    %138 = vmatprep.subr.mxu0 0.0
    %139 = vmatpush1.msra.mxu0 0.0
    %140 = vmatprep.subr.mxu0 0.0
    %141 = vmatpush1.msra.mxu0 0.0
    %142 = vmatprep.subr.mxu0 0.0
    %143 = vmatpush1.msra.mxu0 0.0
    %144 = vmatprep.subr.mxu0 0.0
    %145 = vmatpush1.msra.mxu0 0.0
    %146 = vmatprep.subr.mxu0 0.0
    %147 = vmatpush1.msra.mxu0 0.0
    %148 = vmatprep.subr.mxu0 0.0
    %149 = vmatpush1.msra.mxu0 0.0
    %150 = vmatprep.subr.mxu0 0.0
    %151 = vmatpush1.msra.mxu0 0.0
    %152 = vmatprep.subr.mxu0 0.0
    %153 = vmatpush1.msra.mxu0 0.0
    %154 = vmatprep.subr.mxu0 0.0
    %155 = vmatpush1.msra.mxu0 0.0
    %156 = vmatprep.subr.mxu0 0.0
    %157 = vmatpush1.msra.mxu0 0.0
    %158 = vmatprep.subr.mxu0 0.0
    %159 = vmatpush1.msra.mxu0 0.0
    %160 = vmatprep.subr.mxu0 0.0
    %161 = vmatpush1.msra.mxu0 0.0
    %162 = vmatprep.subr.mxu0 0.0
    %163 = vmatpush1.msra.mxu0 0.0
    %164 = vmatprep.subr.mxu0 0.0
    %165 = vmatpush1.msra.mxu0 0.0
    %166 = vmatprep.mubr.f32.mxu0 0.0
    %167 = vmatmul.mubr.f32.gmra.mrb[0].mxu0 %v97
    %v168 = vpop.f32.mrb[0].mxu0
    %v169 = vadd.f32 %v93, %v168
    %v170 = vpop.f32.mrb[0].mxu0
    %171 = vmatprep.mubr.f32.mxu0 0.0
    %172 = vmatmul.mubr.f32.gmra.mrb[0].mxu0 %v100
    %v173 = vpop.f32.mrb[0].mxu0
    %v174 = vadd.f32 %v93, %v173
    %v175 = vpop.f32.mrb[0].mxu0
    %176 = vdwg.mxu0
    %177 = vst [vmem:[#allocation2] sm:$0xff] %v169
    %178 = vst [vmem:[#allocation2 + $0x8] sm:$0xff] %v174
    %v179 = vld [vmem:[%s2] sm:$0xff]
    %v180 = vld [vmem:[%s2 + $0x8] sm:$0xff]
    %v181 = vld [vmem:[%s2 + $0x10] sm:$0xff]
    %v182 = vld [vmem:[%s2 + $0x18] sm:$0xff]
    %v183 = vpack.c.bf16 %v180, %v179
    %v184 = vpack.c.bf16 %v182, %v181
    %v185 = vld [vmem:[%s4] sm:$0x3]
    %v186 = vld [vmem:[#allocation9] sm:$0x3]
    %v187 = vld [vmem:[#allocation2] sm:$0x3]
    %v188 = vpack.c.bf16 %v185, %v185
    %vm189 = vcmask 261120
    %v191 = vsel %vm189, %v188, 0
    %193 = vmatprep.subr.bf16.mxu0 0
    %194 = vmatpush1.bf16.msra.mxu0 %v183
    %195 = vmatprep.subr.bf16.mxu0 0
    %196 = vmatpush1.bf16.msra.mxu0 %v184
    %197 = vmatprep.subr.bf16.mxu0 0
    %198 = vmatpush1.bf16.msra.mxu0 0
    %199 = vmatprep.subr.bf16.mxu0 0
    %200 = vmatpush1.bf16.msra.mxu0 0
    %201 = vmatprep.subr.bf16.mxu0 0
    %202 = vmatpush1.bf16.msra.mxu0 0
    %203 = vmatprep.subr.bf16.mxu0 0
    %204 = vmatpush1.bf16.msra.mxu0 0
    %205 = vmatprep.subr.bf16.mxu0 0
    %206 = vmatpush1.bf16.msra.mxu0 0
    %207 = vmatprep.subr.bf16.mxu0 0
    %208 = vmatpush1.bf16.msra.mxu0 0
    %209 = vmatprep.subr.bf16.mxu0 0
    %210 = vmatpush1.bf16.msra.mxu0 0
    %211 = vmatprep.subr.bf16.mxu0 0
    %212 = vmatpush1.bf16.msra.mxu0 0
    %213 = vmatprep.subr.bf16.mxu0 0
    %214 = vmatpush1.bf16.msra.mxu0 0
    %215 = vmatprep.subr.bf16.mxu0 0
    %216 = vmatpush1.bf16.msra.mxu0 0
    %217 = vmatprep.subr.bf16.mxu0 0
    %218 = vmatpush1.bf16.msra.mxu0 0
    %219 = vmatprep.subr.bf16.mxu0 0
    %220 = vmatpush1.bf16.msra.mxu0 0
    %221 = vmatprep.subr.bf16.mxu0 0
    %222 = vmatpush1.bf16.msra.mxu0 0
    %223 = vmatprep.subr.bf16.mxu0 0
    %224 = vmatpush1.bf16.msra.mxu0 0
    %225 = vmatprep.mubr.bf16.mxu0 0
    %226 = vmatmul.mubr.bf16.gmra.mrb[0].mxu0 %v191
    %v227 = vpop.f32.mrb[0].mxu0
    %v228 = vadd.f32 0.0, %v227
    %v229 = vpop.f32.mrb[0].mxu0
    %v230 = vpop.f32.mrb[0].mxu0
    %v231 = vpop.f32.mrb[0].mxu0
    %232 = vdwg.mxu0
    %v233 = vadd.f32 %v187, %v228
    %v234 = vmul.f32 %v233, 0.5
    %v235 = vtanh.pop %v234
    %v236 = vmul.f32 %v235, 0.5
    %v237 = vadd.f32 %v236, 0.5
    %v238 = vtanh.pop %v233
    %240 = vrot.lane.b32.xlu0 %v186, 32
    %v241 = vpop.permute.xlu0 %240
    %v243 = vmul.f32 %v237, %v241
    %245 = vrot.lane.b32.xlu0 %v238, 64
    %v246 = vpop.permute.xlu0 %245
    %v248 = vmul.f32 %v237, %v246
    %250 = vrot.lane.b32.xlu0 %v248, 32
    %v251 = vpop.permute.xlu0 %250
    %v253 = vadd.f32 %v243, %v251
    %v254 = vtanh.pop %v253
    %256 = vrot.lane.b32.xlu0 %v254, 64
    %v257 = vpop.permute.xlu0 %256
    %v259 = vmul.f32 %v237, %v257
    %261 = vrot.lane.b32.xlu0 %v259, 32
    %v262 = vpop.permute.xlu0 %261
    %vm264 = vcmask 254976
    %265 = vst.msk [vmem:[#allocation3] sm:$0x3] %vm264, %v262
    %v266 = vld [vmem:[#allocation2 + $0x2] sm:$0x3]
    %v267 = vpack.c.bf16 %v259, %v259
    %269 = vrot.lane.b32.xlu0 %v267, 32
    %v270 = vpop.permute.xlu0 %269
    %v272 = vsel %vm189, %v270, 0
    %274 = vmatprep.subr.bf16.mxu0 0
    %275 = vmatpush1.bf16.msra.mxu0 %v183
    %276 = vmatprep.subr.bf16.mxu0 0
    %277 = vmatpush1.bf16.msra.mxu0 %v184
    %278 = vmatprep.subr.bf16.mxu0 0
    %279 = vmatpush1.bf16.msra.mxu0 0
    %280 = vmatprep.subr.bf16.mxu0 0
    %281 = vmatpush1.bf16.msra.mxu0 0
    %282 = vmatprep.subr.bf16.mxu0 0
    %283 = vmatpush1.bf16.msra.mxu0 0
    %284 = vmatprep.subr.bf16.mxu0 0
    %285 = vmatpush1.bf16.msra.mxu0 0
    %286 = vmatprep.subr.bf16.mxu0 0
    %287 = vmatpush1.bf16.msra.mxu0 0
    %288 = vmatprep.subr.bf16.mxu0 0
    %289 = vmatpush1.bf16.msra.mxu0 0
    %290 = vmatprep.subr.bf16.mxu0 0
    %291 = vmatpush1.bf16.msra.mxu0 0
    %292 = vmatprep.subr.bf16.mxu0 0
    %293 = vmatpush1.bf16.msra.mxu0 0
    %294 = vmatprep.subr.bf16.mxu0 0
    %295 = vmatpush1.bf16.msra.mxu0 0
    %296 = vmatprep.subr.bf16.mxu0 0
    %297 = vmatpush1.bf16.msra.mxu0 0
    %298 = vmatprep.subr.bf16.mxu0 0
    %299 = vmatpush1.bf16.msra.mxu0 0
    %300 = vmatprep.subr.bf16.mxu0 0
    %301 = vmatpush1.bf16.msra.mxu0 0
    %302 = vmatprep.subr.bf16.mxu0 0
    %303 = vmatpush1.bf16.msra.mxu0 0
    %304 = vmatprep.subr.bf16.mxu0 0
    %305 = vmatpush1.bf16.msra.mxu0 0
    %306 = vmatprep.mubr.bf16.mxu0 0
    %307 = vmatmul.mubr.bf16.gmra.mrb[0].mxu0 %v272
    %v308 = vpop.f32.mrb[0].mxu0
    %v309 = vadd.f32 0.0, %v308
    %v310 = vpop.f32.mrb[0].mxu0
    %v311 = vpop.f32.mrb[0].mxu0
    %v312 = vpop.f32.mrb[0].mxu0
    %313 = vdwg.mxu0
    %v314 = vadd.f32 %v266, %v309
    %v315 = vmul.f32 %v314, 0.5
    %v316 = vtanh.pop %v315
    %v317 = vmul.f32 %v316, 0.5
    %v318 = vadd.f32 %v317, 0.5
    %v319 = vtanh.pop %v314
    %v320 = vmul.f32 %v318, %v253
    %322 = vrot.lane.b32.xlu0 %v319, 64
    %v323 = vpop.permute.xlu0 %322
    %v325 = vmul.f32 %v318, %v323
    %327 = vrot.lane.b32.xlu0 %v325, 32
    %v328 = vpop.permute.xlu0 %327
    %v330 = vadd.f32 %v320, %v328
    %v331 = vtanh.pop %v330
    %333 = vrot.lane.b32.xlu0 %v331, 64
    %v334 = vpop.permute.xlu0 %333
    %v336 = vmul.f32 %v318, %v334
    %338 = vrot.lane.b32.xlu0 %v336, 32
    %v339 = vpop.permute.xlu0 %338
    %341 = vst.msk [vmem:[#allocation3 + $0x2] sm:$0x3] %vm264, %v339
    %v342 = vld [vmem:[#allocation2 + $0x4] sm:$0x3]
    %v343 = vpack.c.bf16 %v336, %v336
    %345 = vrot.lane.b32.xlu0 %v343, 32
    %v346 = vpop.permute.xlu0 %345
    %v348 = vsel %vm189, %v346, 0
    %350 = vmatprep.subr.bf16.mxu0 0
    %351 = vmatpush1.bf16.msra.mxu0 %v183
    %352 = vmatprep.subr.bf16.mxu0 0
    %353 = vmatpush1.bf16.msra.mxu0 %v184
    %354 = vmatprep.subr.bf16.mxu0 0
    %355 = vmatpush1.bf16.msra.mxu0 0
    %356 = vmatprep.subr.bf16.mxu0 0
    %357 = vmatpush1.bf16.msra.mxu0 0
    %358 = vmatprep.subr.bf16.mxu0 0
    %359 = vmatpush1.bf16.msra.mxu0 0
    %360 = vmatprep.subr.bf16.mxu0 0
    %361 = vmatpush1.bf16.msra.mxu0 0
    %362 = vmatprep.subr.bf16.mxu0 0
    %363 = vmatpush1.bf16.msra.mxu0 0
    %364 = vmatprep.subr.bf16.mxu0 0
    %365 = vmatpush1.bf16.msra.mxu0 0
    %366 = vmatprep.subr.bf16.mxu0 0
    %367 = vmatpush1.bf16.msra.mxu0 0
    %368 = vmatprep.subr.bf16.mxu0 0
    %369 = vmatpush1.bf16.msra.mxu0 0
    %370 = vmatprep.subr.bf16.mxu0 0
    %371 = vmatpush1.bf16.msra.mxu0 0
    %372 = vmatprep.subr.bf16.mxu0 0
    %373 = vmatpush1.bf16.msra.mxu0 0
    %374 = vmatprep.subr.bf16.mxu0 0
    %375 = vmatpush1.bf16.msra.mxu0 0
    %376 = vmatprep.subr.bf16.mxu0 0
    %377 = vmatpush1.bf16.msra.mxu0 0
    %378 = vmatprep.subr.bf16.mxu0 0
    %379 = vmatpush1.bf16.msra.mxu0 0
    %380 = vmatprep.subr.bf16.mxu0 0
    %381 = vmatpush1.bf16.msra.mxu0 0
    %382 = vmatprep.mubr.bf16.mxu0 0
    %383 = vmatmul.mubr.bf16.gmra.mrb[0].mxu0 %v348
    %v384 = vpop.f32.mrb[0].mxu0
    %v385 = vadd.f32 0.0, %v384
    %v386 = vpop.f32.mrb[0].mxu0
    %v387 = vpop.f32.mrb[0].mxu0
    %v388 = vpop.f32.mrb[0].mxu0
    %389 = vdwg.mxu0
    %v390 = vadd.f32 %v342, %v385
    %v391 = vmul.f32 %v390, 0.5
    %v392 = vtanh.pop %v391
    %v393 = vmul.f32 %v392, 0.5
    %v394 = vadd.f32 %v393, 0.5
    %v395 = vtanh.pop %v390
    %v396 = vmul.f32 %v394, %v330
    %398 = vrot.lane.b32.xlu0 %v395, 64
    %v399 = vpop.permute.xlu0 %398
    %v401 = vmul.f32 %v394, %v399
    %403 = vrot.lane.b32.xlu0 %v401, 32
    %v404 = vpop.permute.xlu0 %403
    %v406 = vadd.f32 %v396, %v404
    %v407 = vtanh.pop %v406
    %409 = vrot.lane.b32.xlu0 %v407, 64
    %v410 = vpop.permute.xlu0 %409
    %v412 = vmul.f32 %v394, %v410
    %414 = vrot.lane.b32.xlu0 %v412, 32
    %v415 = vpop.permute.xlu0 %414
    %417 = vst.msk [vmem:[#allocation3 + $0x4] sm:$0x3] %vm264, %v415
    %v418 = vld [vmem:[#allocation2 + $0x6] sm:$0x3]
    %v419 = vpack.c.bf16 %v412, %v412
    %421 = vrot.lane.b32.xlu0 %v419, 32
    %v422 = vpop.permute.xlu0 %421
    %v424 = vsel %vm189, %v422, 0
    %426 = vmatprep.subr.bf16.mxu0 0
    %427 = vmatpush1.bf16.msra.mxu0 %v183
    %428 = vmatprep.subr.bf16.mxu0 0
    %429 = vmatpush1.bf16.msra.mxu0 %v184
    %430 = vmatprep.subr.bf16.mxu0 0
    %431 = vmatpush1.bf16.msra.mxu0 0
    %432 = vmatprep.subr.bf16.mxu0 0
    %433 = vmatpush1.bf16.msra.mxu0 0
    %434 = vmatprep.subr.bf16.mxu0 0
    %435 = vmatpush1.bf16.msra.mxu0 0
    %436 = vmatprep.subr.bf16.mxu0 0
    %437 = vmatpush1.bf16.msra.mxu0 0
    %438 = vmatprep.subr.bf16.mxu0 0
    %439 = vmatpush1.bf16.msra.mxu0 0
    %440 = vmatprep.subr.bf16.mxu0 0
    %441 = vmatpush1.bf16.msra.mxu0 0
    %442 = vmatprep.subr.bf16.mxu0 0
    %443 = vmatpush1.bf16.msra.mxu0 0
    %444 = vmatprep.subr.bf16.mxu0 0
    %445 = vmatpush1.bf16.msra.mxu0 0
    %446 = vmatprep.subr.bf16.mxu0 0
    %447 = vmatpush1.bf16.msra.mxu0 0
    %448 = vmatprep.subr.bf16.mxu0 0
    %449 = vmatpush1.bf16.msra.mxu0 0
    %450 = vmatprep.subr.bf16.mxu0 0
    %451 = vmatpush1.bf16.msra.mxu0 0
    %452 = vmatprep.subr.bf16.mxu0 0
    %453 = vmatpush1.bf16.msra.mxu0 0
    %454 = vmatprep.subr.bf16.mxu0 0
    %455 = vmatpush1.bf16.msra.mxu0 0
    %456 = vmatprep.subr.bf16.mxu0 0
    %457 = vmatpush1.bf16.msra.mxu0 0
    %458 = vmatprep.mubr.bf16.mxu0 0
    %459 = vmatmul.mubr.bf16.gmra.mrb[0].mxu0 %v424
    %v460 = vpop.f32.mrb[0].mxu0
    %v461 = vadd.f32 0.0, %v460
    %v462 = vpop.f32.mrb[0].mxu0
    %v463 = vpop.f32.mrb[0].mxu0
    %v464 = vpop.f32.mrb[0].mxu0
    %465 = vdwg.mxu0
    %v466 = vadd.f32 %v418, %v461
    %v467 = vmul.f32 %v466, 0.5
    %v468 = vtanh.pop %v467
    %v469 = vmul.f32 %v468, 0.5
    %v470 = vadd.f32 %v469, 0.5
    %v471 = vtanh.pop %v466
    %v472 = vmul.f32 %v470, %v406
    %474 = vrot.lane.b32.xlu0 %v471, 64
    %v475 = vpop.permute.xlu0 %474
    %v477 = vmul.f32 %v470, %v475
    %479 = vrot.lane.b32.xlu0 %v477, 32
    %v480 = vpop.permute.xlu0 %479
    %v482 = vadd.f32 %v472, %v480
    %v483 = vtanh.pop %v482
    %485 = vrot.lane.b32.xlu0 %v483, 64
    %v486 = vpop.permute.xlu0 %485
    %v488 = vmul.f32 %v470, %v486
    %490 = vrot.lane.b32.xlu0 %v488, 32
    %v491 = vpop.permute.xlu0 %490
    %493 = vst.msk [vmem:[#allocation3 + $0x6] sm:$0x3] %vm264, %v491
    %v494 = vld [vmem:[#allocation2 + $0x8] sm:$0x3]
    %v495 = vpack.c.bf16 %v488, %v488
    %497 = vrot.lane.b32.xlu0 %v495, 32
    %v498 = vpop.permute.xlu0 %497
    %v500 = vsel %vm189, %v498, 0
    %502 = vmatprep.subr.bf16.mxu0 0
    %503 = vmatpush1.bf16.msra.mxu0 %v183
    %504 = vmatprep.subr.bf16.mxu0 0
    %505 = vmatpush1.bf16.msra.mxu0 %v184
    %506 = vmatprep.subr.bf16.mxu0 0
    %507 = vmatpush1.bf16.msra.mxu0 0
    %508 = vmatprep.subr.bf16.mxu0 0
    %509 = vmatpush1.bf16.msra.mxu0 0
    %510 = vmatprep.subr.bf16.mxu0 0
    %511 = vmatpush1.bf16.msra.mxu0 0
    %512 = vmatprep.subr.bf16.mxu0 0
    %513 = vmatpush1.bf16.msra.mxu0 0
    %514 = vmatprep.subr.bf16.mxu0 0
    %515 = vmatpush1.bf16.msra.mxu0 0
    %516 = vmatprep.subr.bf16.mxu0 0
    %517 = vmatpush1.bf16.msra.mxu0 0
    %518 = vmatprep.subr.bf16.mxu0 0
    %519 = vmatpush1.bf16.msra.mxu0 0
    %520 = vmatprep.subr.bf16.mxu0 0
    %521 = vmatpush1.bf16.msra.mxu0 0
    %522 = vmatprep.subr.bf16.mxu0 0
    %523 = vmatpush1.bf16.msra.mxu0 0
    %524 = vmatprep.subr.bf16.mxu0 0
    %525 = vmatpush1.bf16.msra.mxu0 0
    %526 = vmatprep.subr.bf16.mxu0 0
    %527 = vmatpush1.bf16.msra.mxu0 0
    %528 = vmatprep.subr.bf16.mxu0 0
    %529 = vmatpush1.bf16.msra.mxu0 0
    %530 = vmatprep.subr.bf16.mxu0 0
    %531 = vmatpush1.bf16.msra.mxu0 0
    %532 = vmatprep.subr.bf16.mxu0 0
    %533 = vmatpush1.bf16.msra.mxu0 0
    %534 = vmatprep.mubr.bf16.mxu0 0
    %535 = vmatmul.mubr.bf16.gmra.mrb[0].mxu0 %v500
    %v536 = vpop.f32.mrb[0].mxu0
    %v537 = vadd.f32 0.0, %v536
    %v538 = vpop.f32.mrb[0].mxu0
    %v539 = vpop.f32.mrb[0].mxu0
    %v540 = vpop.f32.mrb[0].mxu0
    %541 = vdwg.mxu0
    %v542 = vadd.f32 %v494, %v537
    %v543 = vmul.f32 %v542, 0.5
    %v544 = vtanh.pop %v543
    %v545 = vmul.f32 %v544, 0.5
    %v546 = vadd.f32 %v545, 0.5
    %v547 = vtanh.pop %v542
    %v548 = vmul.f32 %v546, %v482
    %550 = vrot.lane.b32.xlu0 %v547, 64
    %v551 = vpop.permute.xlu0 %550
    %v553 = vmul.f32 %v546, %v551
    %555 = vrot.lane.b32.xlu0 %v553, 32
    %v556 = vpop.permute.xlu0 %555
    %v558 = vadd.f32 %v548, %v556
    %v559 = vtanh.pop %v558
    %561 = vrot.lane.b32.xlu0 %v559, 64
    %v562 = vpop.permute.xlu0 %561
    %v564 = vmul.f32 %v546, %v562
    %566 = vrot.lane.b32.xlu0 %v564, 32
    %v567 = vpop.permute.xlu0 %566
    %569 = vst.msk [vmem:[#allocation3 + $0x8] sm:$0x3] %vm264, %v567
    %v570 = vld [vmem:[#allocation2 + $0xa] sm:$0x3]
    %v571 = vpack.c.bf16 %v564, %v564
    %573 = vrot.lane.b32.xlu0 %v571, 32
    %v574 = vpop.permute.xlu0 %573
    %v576 = vsel %vm189, %v574, 0
    %578 = vmatprep.subr.bf16.mxu0 0
    %579 = vmatpush1.bf16.msra.mxu0 %v183
    %580 = vmatprep.subr.bf16.mxu0 0
    %581 = vmatpush1.bf16.msra.mxu0 %v184
    %582 = vmatprep.subr.bf16.mxu0 0
    %583 = vmatpush1.bf16.msra.mxu0 0
    %584 = vmatprep.subr.bf16.mxu0 0
    %585 = vmatpush1.bf16.msra.mxu0 0
    %586 = vmatprep.subr.bf16.mxu0 0
    %587 = vmatpush1.bf16.msra.mxu0 0
    %588 = vmatprep.subr.bf16.mxu0 0
    %589 = vmatpush1.bf16.msra.mxu0 0
    %590 = vmatprep.subr.bf16.mxu0 0
    %591 = vmatpush1.bf16.msra.mxu0 0
    %592 = vmatprep.subr.bf16.mxu0 0
    %593 = vmatpush1.bf16.msra.mxu0 0
    %594 = vmatprep.subr.bf16.mxu0 0
    %595 = vmatpush1.bf16.msra.mxu0 0
    %596 = vmatprep.subr.bf16.mxu0 0
    %597 = vmatpush1.bf16.msra.mxu0 0
    %598 = vmatprep.subr.bf16.mxu0 0
    %599 = vmatpush1.bf16.msra.mxu0 0
    %600 = vmatprep.subr.bf16.mxu0 0
    %601 = vmatpush1.bf16.msra.mxu0 0
    %602 = vmatprep.subr.bf16.mxu0 0
    %603 = vmatpush1.bf16.msra.mxu0 0
    %604 = vmatprep.subr.bf16.mxu0 0
    %605 = vmatpush1.bf16.msra.mxu0 0
    %606 = vmatprep.subr.bf16.mxu0 0
    %607 = vmatpush1.bf16.msra.mxu0 0
    %608 = vmatprep.subr.bf16.mxu0 0
    %609 = vmatpush1.bf16.msra.mxu0 0
    %610 = vmatprep.mubr.bf16.mxu0 0
    %611 = vmatmul.mubr.bf16.gmra.mrb[0].mxu0 %v576
    %v612 = vpop.f32.mrb[0].mxu0
    %v613 = vadd.f32 0.0, %v612
    %v614 = vpop.f32.mrb[0].mxu0
    %v615 = vpop.f32.mrb[0].mxu0
    %v616 = vpop.f32.mrb[0].mxu0
    %617 = vdwg.mxu0
    %v618 = vadd.f32 %v570, %v613
    %v619 = vmul.f32 %v618, 0.5
    %v620 = vtanh.pop %v619
    %v621 = vmul.f32 %v620, 0.5
    %v622 = vadd.f32 %v621, 0.5
    %v623 = vtanh.pop %v618
    %v624 = vmul.f32 %v622, %v558
    %626 = vrot.lane.b32.xlu0 %v623, 64
    %v627 = vpop.permute.xlu0 %626
    %v629 = vmul.f32 %v622, %v627
    %631 = vrot.lane.b32.xlu0 %v629, 32
    %v632 = vpop.permute.xlu0 %631
    %v634 = vadd.f32 %v624, %v632
    %v635 = vtanh.pop %v634
    %637 = vrot.lane.b32.xlu0 %v635, 64
    %v638 = vpop.permute.xlu0 %637
    %v640 = vmul.f32 %v622, %v638
    %642 = vrot.lane.b32.xlu0 %v640, 32
    %v643 = vpop.permute.xlu0 %642
    %645 = vst.msk [vmem:[#allocation3 + $0xa] sm:$0x3] %vm264, %v643
    %v646 = vld [vmem:[#allocation2 + $0xc] sm:$0x3]
    %v647 = vpack.c.bf16 %v640, %v640
    %649 = vrot.lane.b32.xlu0 %v647, 32
    %v650 = vpop.permute.xlu0 %649
    %v652 = vsel %vm189, %v650, 0
    %654 = vmatprep.subr.bf16.mxu0 0
    %655 = vmatpush1.bf16.msra.mxu0 %v183
    %656 = vmatprep.subr.bf16.mxu0 0
    %657 = vmatpush1.bf16.msra.mxu0 %v184
    %658 = vmatprep.subr.bf16.mxu0 0
    %659 = vmatpush1.bf16.msra.mxu0 0
    %660 = vmatprep.subr.bf16.mxu0 0
    %661 = vmatpush1.bf16.msra.mxu0 0
    %662 = vmatprep.subr.bf16.mxu0 0
    %663 = vmatpush1.bf16.msra.mxu0 0
    %664 = vmatprep.subr.bf16.mxu0 0
    %665 = vmatpush1.bf16.msra.mxu0 0
    %666 = vmatprep.subr.bf16.mxu0 0
    %667 = vmatpush1.bf16.msra.mxu0 0
    %668 = vmatprep.subr.bf16.mxu0 0
    %669 = vmatpush1.bf16.msra.mxu0 0
    %670 = vmatprep.subr.bf16.mxu0 0
    %671 = vmatpush1.bf16.msra.mxu0 0
    %672 = vmatprep.subr.bf16.mxu0 0
    %673 = vmatpush1.bf16.msra.mxu0 0
    %674 = vmatprep.subr.bf16.mxu0 0
    %675 = vmatpush1.bf16.msra.mxu0 0
    %676 = vmatprep.subr.bf16.mxu0 0
    %677 = vmatpush1.bf16.msra.mxu0 0
    %678 = vmatprep.subr.bf16.mxu0 0
    %679 = vmatpush1.bf16.msra.mxu0 0
    %680 = vmatprep.subr.bf16.mxu0 0
    %681 = vmatpush1.bf16.msra.mxu0 0
    %682 = vmatprep.subr.bf16.mxu0 0
    %683 = vmatpush1.bf16.msra.mxu0 0
    %684 = vmatprep.subr.bf16.mxu0 0
    %685 = vmatpush1.bf16.msra.mxu0 0
    %686 = vmatprep.mubr.bf16.mxu0 0
    %687 = vmatmul.mubr.bf16.gmra.mrb[0].mxu0 %v652
    %v688 = vpop.f32.mrb[0].mxu0
    %v689 = vadd.f32 0.0, %v688
    %v690 = vpop.f32.mrb[0].mxu0
    %v691 = vpop.f32.mrb[0].mxu0
    %v692 = vpop.f32.mrb[0].mxu0
    %693 = vdwg.mxu0
    %v694 = vadd.f32 %v646, %v689
    %v695 = vmul.f32 %v694, 0.5
    %v696 = vtanh.pop %v695
    %v697 = vmul.f32 %v696, 0.5
    %v698 = vadd.f32 %v697, 0.5
    %v699 = vtanh.pop %v694
    %v700 = vmul.f32 %v698, %v634
    %702 = vrot.lane.b32.xlu0 %v699, 64
    %v703 = vpop.permute.xlu0 %702
    %v705 = vmul.f32 %v698, %v703
    %707 = vrot.lane.b32.xlu0 %v705, 32
    %v708 = vpop.permute.xlu0 %707
    %v710 = vadd.f32 %v700, %v708
    %v711 = vtanh.pop %v710
    %713 = vrot.lane.b32.xlu0 %v711, 64
    %v714 = vpop.permute.xlu0 %713
    %v716 = vmul.f32 %v698, %v714
    %718 = vrot.lane.b32.xlu0 %v716, 32
    %v719 = vpop.permute.xlu0 %718
    %721 = vst.msk [vmem:[#allocation3 + $0xc] sm:$0x3] %vm264, %v719
    %v722 = vld [vmem:[#allocation2 + $0xe] sm:$0x3]
    %v723 = vpack.c.bf16 %v716, %v716
    %725 = vrot.lane.b32.xlu0 %v723, 32
    %v726 = vpop.permute.xlu0 %725
    %v728 = vsel %vm189, %v726, 0
    %730 = vmatprep.subr.bf16.mxu0 0
    %731 = vmatpush1.bf16.msra.mxu0 %v183
    %732 = vmatprep.subr.bf16.mxu0 0
    %733 = vmatpush1.bf16.msra.mxu0 %v184
    %734 = vmatprep.subr.bf16.mxu0 0
    %735 = vmatpush1.bf16.msra.mxu0 0
    %736 = vmatprep.subr.bf16.mxu0 0
    %737 = vmatpush1.bf16.msra.mxu0 0
    %738 = vmatprep.subr.bf16.mxu0 0
    %739 = vmatpush1.bf16.msra.mxu0 0
    %740 = vmatprep.subr.bf16.mxu0 0
    %741 = vmatpush1.bf16.msra.mxu0 0
    %742 = vmatprep.subr.bf16.mxu0 0
    %743 = vmatpush1.bf16.msra.mxu0 0
    %744 = vmatprep.subr.bf16.mxu0 0
    %745 = vmatpush1.bf16.msra.mxu0 0
    %746 = vmatprep.subr.bf16.mxu0 0
    %747 = vmatpush1.bf16.msra.mxu0 0
    %748 = vmatprep.subr.bf16.mxu0 0
    %749 = vmatpush1.bf16.msra.mxu0 0
    %750 = vmatprep.subr.bf16.mxu0 0
    %751 = vmatpush1.bf16.msra.mxu0 0
    %752 = vmatprep.subr.bf16.mxu0 0
    %753 = vmatpush1.bf16.msra.mxu0 0
    %754 = vmatprep.subr.bf16.mxu0 0
    %755 = vmatpush1.bf16.msra.mxu0 0
    %756 = vmatprep.subr.bf16.mxu0 0
    %757 = vmatpush1.bf16.msra.mxu0 0
    %758 = vmatprep.subr.bf16.mxu0 0
    %759 = vmatpush1.bf16.msra.mxu0 0
    %760 = vmatprep.subr.bf16.mxu0 0
    %761 = vmatpush1.bf16.msra.mxu0 0
    %762 = vmatprep.mubr.bf16.mxu0 0
    %763 = vmatmul.mubr.bf16.gmra.mrb[0].mxu0 %v728
    %v764 = vpop.f32.mrb[0].mxu0
    %v765 = vadd.f32 0.0, %v764
    %v766 = vpop.f32.mrb[0].mxu0
    %v767 = vpop.f32.mrb[0].mxu0
    %v768 = vpop.f32.mrb[0].mxu0
    %769 = vdwg.mxu0
    %v770 = vadd.f32 %v722, %v765
    %v771 = vmul.f32 %v770, 0.5
    %v772 = vtanh.pop %v771
    %v773 = vmul.f32 %v772, 0.5
    %v774 = vadd.f32 %v773, 0.5
    %v775 = vtanh.pop %v770
    %v776 = vmul.f32 %v774, %v710
    %778 = vrot.lane.b32.xlu0 %v775, 64
    %v779 = vpop.permute.xlu0 %778
    %v781 = vmul.f32 %v774, %v779
    %783 = vrot.lane.b32.xlu0 %v781, 32
    %v784 = vpop.permute.xlu0 %783
    %v786 = vadd.f32 %v776, %v784
    %v787 = vtanh.pop %v786
    %789 = vrot.lane.b32.xlu0 %v787, 64
    %v790 = vpop.permute.xlu0 %789
    %v792 = vmul.f32 %v774, %v790
    %794 = vrot.lane.b32.xlu0 %v792, 32
    %v795 = vpop.permute.xlu0 %794
    %797 = vst.msk [vmem:[#allocation3 + $0xe] sm:$0x3] %vm264, %v795
    %v798 = vld [vmem:[#allocation3] sm:$0xff]
    %v799 = vld [vmem:[#allocation3 + $0x8] sm:$0xff]
    %v800 = vld [vmem:[%s6] sm:$0xff]
    %v801 = vld [vmem:[%s6 + $0x8] sm:$0xff]
    %v802 = vld [vmem:[%s6 + $0x10] sm:$0xff]
    %v803 = vld [vmem:[%s6 + $0x18] sm:$0xff]
    %v804 = vld [vmem:[#allocation10] sm:$0x1]
    %v806 = vlaneseq
    %v807 = vshrl.u32 %v806, 7
    %v808 = vsub.s32 0, %v807
    %v809 = vrot.slane %v804, %v808
    %v812 = vsel %vm189, %v798, 0
    %v815 = vsel %vm189, %v799, 0
    %817 = vmatprep.subr.mxu0 0.0
    %818 = vmatpush1.msra.mxu0 %v800
    %819 = vmatprep.subr.mxu0 0.0
    %820 = vmatpush1.msra.mxu0 %v801
    %821 = vmatprep.subr.mxu0 0.0
    %822 = vmatpush1.msra.mxu0 %v802
    %823 = vmatprep.subr.mxu0 0.0
    %824 = vmatpush1.msra.mxu0 %v803
    %825 = vmatprep.subr.mxu0 0.0
    %826 = vmatpush1.msra.mxu0 0.0
    %827 = vmatprep.subr.mxu0 0.0
    %828 = vmatpush1.msra.mxu0 0.0
    %829 = vmatprep.subr.mxu0 0.0
    %830 = vmatpush1.msra.mxu0 0.0
    %831 = vmatprep.subr.mxu0 0.0
    %832 = vmatpush1.msra.mxu0 0.0
    %833 = vmatprep.subr.mxu0 0.0
    %834 = vmatpush1.msra.mxu0 0.0
    %835 = vmatprep.subr.mxu0 0.0
    %836 = vmatpush1.msra.mxu0 0.0
    %837 = vmatprep.subr.mxu0 0.0
    %838 = vmatpush1.msra.mxu0 0.0
    %839 = vmatprep.subr.mxu0 0.0
    %840 = vmatpush1.msra.mxu0 0.0
    %841 = vmatprep.subr.mxu0 0.0
    %842 = vmatpush1.msra.mxu0 0.0
    %843 = vmatprep.subr.mxu0 0.0
    %844 = vmatpush1.msra.mxu0 0.0
    %845 = vmatprep.subr.mxu0 0.0
    %846 = vmatpush1.msra.mxu0 0.0
    %847 = vmatprep.subr.mxu0 0.0
    %848 = vmatpush1.msra.mxu0 0.0
    %849 = vmatprep.subr.mxu0 0.0
    %850 = vmatpush1.msra.mxu0 0.0
    %851 = vmatprep.subr.mxu0 0.0
    %852 = vmatpush1.msra.mxu0 0.0
    %853 = vmatprep.subr.mxu0 0.0
    %854 = vmatpush1.msra.mxu0 0.0
    %855 = vmatprep.subr.mxu0 0.0
    %856 = vmatpush1.msra.mxu0 0.0
    %857 = vmatprep.subr.mxu0 0.0
    %858 = vmatpush1.msra.mxu0 0.0
    %859 = vmatprep.subr.mxu0 0.0
    %860 = vmatpush1.msra.mxu0 0.0
    %861 = vmatprep.subr.mxu0 0.0
    %862 = vmatpush1.msra.mxu0 0.0
    %863 = vmatprep.subr.mxu0 0.0
    %864 = vmatpush1.msra.mxu0 0.0
    %865 = vmatprep.subr.mxu0 0.0
    %866 = vmatpush1.msra.mxu0 0.0
    %867 = vmatprep.subr.mxu0 0.0
    %868 = vmatpush1.msra.mxu0 0.0
    %869 = vmatprep.subr.mxu0 0.0
    %870 = vmatpush1.msra.mxu0 0.0
    %871 = vmatprep.subr.mxu0 0.0
    %872 = vmatpush1.msra.mxu0 0.0
    %873 = vmatprep.subr.mxu0 0.0
    %874 = vmatpush1.msra.mxu0 0.0
    %875 = vmatprep.subr.mxu0 0.0
    %876 = vmatpush1.msra.mxu0 0.0
    %877 = vmatprep.subr.mxu0 0.0
    %878 = vmatpush1.msra.mxu0 0.0
    %879 = vmatprep.subr.mxu0 0.0
    %880 = vmatpush1.msra.mxu0 0.0
    %881 = vmatprep.mubr.f32.mxu0 0.0
    %882 = vmatmul.mubr.f32.gmra.mrb[0].mxu0 %v812
    %v883 = vpop.f32.mrb[0].mxu0
    %v884 = vadd.f32 %v809, %v883
    %v885 = vpop.f32.mrb[0].mxu0
    %886 = vmatprep.mubr.f32.mxu0 0.0
    %887 = vmatmul.mubr.f32.gmra.mrb[0].mxu0 %v815
    %v888 = vpop.f32.mrb[0].mxu0
    %v889 = vadd.f32 %v809, %v888
    %v890 = vpop.f32.mrb[0].mxu0
    %891 = vdwg.mxu0
    %vm892 = vcmask 523264
    %893 = vst.msk [vmem:[%s8] sm:$0xff] %vm892, %v884
    %894 = vst.msk [vmem:[%s8 + $0x8] sm:$0xff] %vm892, %v889
    %895 = vst.msk [vmem:[#allocation12] sm:$0x3] %vm264, %v795
    %897 = vrot.lane.b32.xlu0 %v786, 96
    %v898 = vpop.permute.xlu0 %897
    %900 = vst.msk [vmem:[#allocation13] sm:$0x3] %vm264, %v898
    // Predicated region
    $region50: #{decoder_forward.1} parent=1 // pred_check
      _
    $region51: #{decoder_forward.1} parent=1 // pred_check_branch
      %902 = sbr.rel (0) target = $region53
    $region52: #{decoder_forward.1} parent=1 // pred_region
      _
    $region53: #{decoder_forward.1} parent=1 // pred_fallthru
      _
    // Predicated region
    $region54: #{decoder_forward.1} parent=1 // pred_check
      _
    $region55: #{decoder_forward.1} parent=1 // pred_check_branch
      %904 = sbr.rel (0) target = $region57
    $region56: #{decoder_forward.1} parent=1 // pred_region
      %s906 = ssub.s32 32, 32
      %907 = vsyncadd [#allocation6], %s906
      %s909 = sshll.u32 [#allocation12], 4
      %s910 = int_to_ptr.vmem [resolvable:$true] %s909
      %912 = dma.vmem_to_hbm [thread:$0]  %s910, 32, %s9, [#allocation6]
    $region57: #{decoder_forward.1} parent=1 // pred_fallthru
      _
    // Predicated region
    $region58: #{decoder_forward.1} parent=1 // pred_check
      _
    $region59: #{decoder_forward.1} parent=1 // pred_check_branch
      %914 = sbr.rel (0) target = $region61
    $region60: #{decoder_forward.1} parent=1 // pred_region
      %s916 = ssub.s32 32, 32
      %917 = vsyncadd [#allocation14], %s916
      %s919 = sshll.u32 [#allocation13], 4
      %s920 = int_to_ptr.vmem [resolvable:$true] %s919
      %922 = dma.vmem_to_hbm [thread:$0]  %s920, 32, %s10, [#allocation14]
    $region61: #{decoder_forward.1} parent=1 // pred_fallthru
      _
    // Predicated region
    $region62: #{decoder_forward.1} parent=1 // pred_check
      _
    $region63: #{decoder_forward.1} parent=1 // pred_check_branch
      %924 = sbr.rel (0) target = $region65
    $region64: #{decoder_forward.1} parent=1 // pred_region
      _
    $region65: #{decoder_forward.1} parent=1 // pred_fallthru
      _
    // Predicated region
    $region66: #{decoder_forward.1} parent=1 // pred_check
      _
    $region67: #{decoder_forward.1} parent=1 // pred_check_branch
      %926 = sbr.rel (0) target = $region69
    $region68: #{decoder_forward.1} parent=1 // pred_region
      %927 = dma.done [#allocation6], 32
    $region69: #{decoder_forward.1} parent=1 // pred_fallthru
      _
    // Predicated region
    $region70: #{decoder_forward.1} parent=1 // pred_check
      _
    $region71: #{decoder_forward.1} parent=1 // pred_check_branch
      %929 = sbr.rel (0) target = $region73
    $region72: #{decoder_forward.1} parent=1 // pred_region
      %930 = dma.done [#allocation14], 32
    $region73: #{decoder_forward.1} parent=1 // pred_fallthru
      _
    %931 = vsyncpa [#allocation5], 1
    %932 = vsyncpa [#allocation8], 1
    %933 = vsyncpa [#allocation11], 1
    %934 = vsyncpa [#allocation6], 1
    %935 = vsyncpa [#allocation14], 1

</llo_original>
